<compile_context>
chip_gen: v6e
topology: v6e:2x2x1
jax: 0.10.0
libtpu: 0.0.40
codegen_flags: <defaults>
</compile_context>

<pallas_src>
import functools

import jax
import jax.numpy as jnp
from jax import lax
from jax.experimental import pallas as pl
from jax.experimental.pallas import tpu as pltpu


# ----------------------------- kernel helpers -----------------------------

def _depthwise3x3_flat(v, taps, bias, mask_l, mask_r, H, W):
    """Depthwise 3x3 conv, padding=1, on a lane-dense (C, H*W) slab.

    v:      (C, H*W) f32
    taps:   (C, 9)   f32   taps[c, 3*(dh+1) + (dw+1)]
    bias:   (C, 1)   f32
    mask_l: (1, H*W) f32   1.0 where column j != 0    (valid when reading j-1)
    mask_r: (1, H*W) f32   1.0 where column j != W-1  (valid when reading j+1)
    """
    C, HW = v.shape
    z = jnp.zeros((C, W + 1), v.dtype)              # one zero slab, sliced per tap
    acc = jnp.zeros((C, HW), jnp.float32)
    for t in range(9):
        dh, dw = t // 3 - 1, t % 3 - 1
        s = dh * W + dw                              # flat shift: read v[:, p + s]
        if s > 0:                                    # zero-fill handles the H edges
            sh = jnp.concatenate([v[:, s:], z[:, :s]], axis=1)
        elif s < 0:
            sh = jnp.concatenate([z[:, : -s], v[:, :s]], axis=1)
        else:
            sh = v
        if dw == -1:                                 # W edges need an explicit mask
            sh = sh * mask_l
        elif dw == 1:
            sh = sh * mask_r
        acc = acc + sh * taps[:, t:t + 1]
    return acc + bias


# --------------------------------- kernel ---------------------------------

def spatialencoder_kernel(x_ref, w1_ref, b1_ref, w2_ref, b2_ref,
                          w3_ref, b3_ref, we_ref, be_ref, out_ref, *, H, W):
    HW = H * W
    x = x_ref[0].astype(jnp.float32)                          # (C_in, HW)

    # Edge masks, computed once per grid step (hoisted out of the tap loops).
    col = lax.broadcasted_iota(jnp.int32, (1, HW), 1) % W
    mask_l = (col != 0).astype(jnp.float32)
    mask_r = (col != W - 1).astype(jnp.float32)

    # conv1: depthwise 3x3 (bn1 pre-folded) + ReLU              (VPU)
    h1 = jnp.maximum(
        _depthwise3x3_flat(x, w1_ref[...], b1_ref[...], mask_l, mask_r, H, W), 0.0)
    # conv2: 1x1 pointwise                                      (MXU)
    h2 = jnp.dot(w2_ref[...], h1, preferred_element_type=jnp.float32) + b2_ref[...]
    # conv3: depthwise 3x3                                      (VPU)
    h3 = _depthwise3x3_flat(h2, w3_ref[...], b3_ref[...], mask_l, mask_r, H, W)
    # extra branch: 1x1 conv + BN (pre-folded) on the original input   (MXU)
    extra = jnp.dot(we_ref[...], x, preferred_element_type=jnp.float32) + be_ref[...]

    # fused residual add + ReLU; single lane-dense store
    out_ref[0] = jnp.maximum(extra + h3, 0.0).astype(out_ref.dtype)


# -------------------------------- wrapper ---------------------------------

def spatialencoder(x, params, stride=1, eps=1e-5):
    assert stride == 1, "only the module default stride=1 is implemented"
    B, C_in, H, W = x.shape
    C_out = params["w2"].shape[0]
    HW = H * W

    # ---- fold BatchNorms (inference form) into the preceding convs ----
    s1 = params["bn1_gamma"] * lax.rsqrt(params["bn1_var"] + eps)      # (C_in,)
    w1k = params["w1"].reshape(C_in, 9) * s1[:, None]                  # (C_in, 9)
    b1k = ((params["b1"] - params["bn1_mean"]) * s1
           + params["bn1_beta"]).reshape(C_in, 1)

    se = params["bne_gamma"] * lax.rsqrt(params["bne_var"] + eps)      # (C_out,)
    wek = params["we"][:, :, 0, 0] * se[:, None]                       # (C_out, C_in)
    bek = ((params["be"] - params["bne_mean"]) * se
           + params["bne_beta"]).reshape(C_out, 1)

    w2k = params["w2"][:, :, 0, 0]                                     # (C_out, C_in)
    b2k = params["b2"].reshape(C_out, 1)
    w3k = params["w3"].reshape(C_out, 9)                               # (C_out, 9)
    b3k = params["b3"].reshape(C_out, 1)

    # lane-dense view: spatial dims flattened onto the lane axis
    x_flat = x.reshape(B, C_in, HW)

    full2 = lambda b: (0, 0)

    out_flat = pl.pallas_call(
        functools.partial(spatialencoder_kernel, H=H, W=W),
        out_shape=jax.ShapeDtypeStruct((B, C_out, HW), x.dtype),
        grid_spec=pltpu.PrefetchScalarGridSpec(
            num_scalar_prefetch=0,
            grid=(B,),
            in_specs=[
                pl.BlockSpec((1, C_in, HW), lambda b: (b, 0, 0)),      # x (lane-dense)
                pl.BlockSpec((C_in, 9), full2),                        # conv1 dw taps (BN folded)
                pl.BlockSpec((C_in, 1), full2),                        # conv1 bias (BN folded)
                pl.BlockSpec((C_out, C_in), full2),                    # conv2 1x1 weight
                pl.BlockSpec((C_out, 1), full2),                       # conv2 bias
                pl.BlockSpec((C_out, 9), full2),                       # conv3 dw taps
                pl.BlockSpec((C_out, 1), full2),                       # conv3 bias
                pl.BlockSpec((C_out, C_in), full2),                    # extra 1x1 weight (BN folded)
                pl.BlockSpec((C_out, 1), full2),                       # extra bias (BN folded)
            ],
            out_specs=pl.BlockSpec((1, C_out, HW), lambda b: (b, 0, 0)),
        ),
        compiler_params=pltpu.CompilerParams(
            dimension_semantics=("parallel",)),
    )(x_flat, w1k, b1k, w2k, b2k, w3k, b3k, wek, bek)
    return out_flat.reshape(B, C_out, H, W)


# ------------------------------ pure-JAX reference ------------------------

def _reference(x, params, eps=1e-5):
    def conv(inp, w, b, groups=1):
        pad = (w.shape[2] - 1) // 2
        y = lax.conv_general_dilated(
            inp, w, window_strides=(1, 1),
            padding=((pad, pad), (pad, pad)),
            dimension_numbers=("NCHW", "OIHW", "NCHW"),
            feature_group_count=groups)
        return y + b[None, :, None, None]

    def bn(z, g, beta, m, v):
        s = g * lax.rsqrt(v + eps)
        return ((z - m[None, :, None, None]) * s[None, :, None, None]
                + beta[None, :, None, None])

    C_in = x.shape[1]
    C_out = params["w2"].shape[0]
    h = jax.nn.relu(bn(conv(x, params["w1"], params["b1"], groups=C_in),
                       params["bn1_gamma"], params["bn1_beta"],
                       params["bn1_mean"], params["bn1_var"]))
    h = conv(h, params["w2"], params["b2"])
    h = conv(h, params["w3"], params["b3"], groups=C_out)
    e = bn(conv(x, params["we"], params["be"]),
           params["bne_gamma"], params["bne_beta"],
           params["bne_mean"], params["bne_var"])
    return jax.nn.relu(e + h)


# ---------------------------------- demo ----------------------------------

if __name__ == "__main__":
    key = jax.random.PRNGKey(0)
    B, C_in, C_out, H, W = 2, 4, 8, 16, 16
    ks = jax.random.split(key, 17)

    x = jax.random.normal(ks[0], (B, C_in, H, W), jnp.float32)

    params = dict(
        # conv1: depthwise 3x3 on C_in channels (+ bias), followed by bn1
        w1=jax.random.normal(ks[1], (C_in, 1, 3, 3), jnp.float32) * 0.3,
        b1=jax.random.normal(ks[2], (C_in,), jnp.float32) * 0.1,
        bn1_gamma=1.0 + 0.1 * jax.random.normal(ks[3], (C_in,), jnp.float32),
        bn1_beta=0.1 * jax.random.normal(ks[4], (C_in,), jnp.float32),
        bn1_mean=0.1 * jax.random.normal(ks[5], (C_in,), jnp.float32),
        bn1_var=jnp.abs(jax.random.normal(ks[6], (C_in,), jnp.float32)) + 0.5,
        # conv2: 1x1, C_in -> C_out (+ bias)
        w2=jax.random.normal(ks[7], (C_out, C_in, 1, 1), jnp.float32) * 0.3,
        b2=jax.random.normal(ks[8], (C_out,), jnp.float32) * 0.1,
        # conv3: depthwise 3x3 on C_out channels (+ bias)
        w3=jax.random.normal(ks[9], (C_out, 1, 3, 3), jnp.float32) * 0.3,
        b3=jax.random.normal(ks[10], (C_out,), jnp.float32) * 0.1,
        # extra: 1x1 conv C_in -> C_out (+ bias), followed by BN
        we=jax.random.normal(ks[11], (C_out, C_in, 1, 1), jnp.float32) * 0.3,
        be=jax.random.normal(ks[12], (C_out,), jnp.float32) * 0.1,
        bne_gamma=1.0 + 0.1 * jax.random.normal(ks[13], (C_out,), jnp.float32),
        bne_beta=0.1 * jax.random.normal(ks[14], (C_out,), jnp.float32),
        bne_mean=0.1 * jax.random.normal(ks[15], (C_out,), jnp.float32),
        bne_var=jnp.abs(jax.random.normal(ks[16], (C_out,), jnp.float32)) + 0.5,
    )

    out = spatialencoder(x, params)
    out = jax.block_until_ready(out)

    ref = _reference(x, params)
    assert out.shape == (B, C_out, H, W), "shape mismatch"
    assert jnp.allclose(out, ref, rtol=2e-4, atol=2e-4), "output mismatch vs reference"

    print("KERNEL_OK")
</pallas_src>

<mosaic_0001>
module attributes {stable_mosaic.version = 11 : i64} {
  func.func @spatialencoder_kernel(%arg0: i32, %arg1: memref<1x4x256xf32, #tpu.memory_space<vmem>>, %arg2: memref<4x9xf32, #tpu.memory_space<vmem>>, %arg3: memref<4x1xf32, #tpu.memory_space<vmem>>, %arg4: memref<8x4xf32, #tpu.memory_space<vmem>>, %arg5: memref<8x1xf32, #tpu.memory_space<vmem>>, %arg6: memref<8x9xf32, #tpu.memory_space<vmem>>, %arg7: memref<8x1xf32, #tpu.memory_space<vmem>>, %arg8: memref<8x4xf32, #tpu.memory_space<vmem>>, %arg9: memref<8x1xf32, #tpu.memory_space<vmem>>, %arg10: memref<1x8x256xf32, #tpu.memory_space<vmem>>) attributes {dimension_semantics = [#tpu.dimension_semantics<parallel>], iteration_bounds = array<i64: 2>, scalar_prefetch = 0 : i64, scratch_operands = 0 : i64, tpu.core_type = #tpu.core_type<tc>, window_params = [{transform_indices = @transform_0, window_bounds = array<i64: 1, 4, 256>}, {pipeline_mode = #tpu.pipeline_mode<synchronous>, transform_indices = @transform_1, window_bounds = array<i64: 4, 9>}, {pipeline_mode = #tpu.pipeline_mode<synchronous>, transform_indices = @transform_2, window_bounds = array<i64: 4, 1>}, {pipeline_mode = #tpu.pipeline_mode<synchronous>, transform_indices = @transform_3, window_bounds = array<i64: 8, 4>}, {pipeline_mode = #tpu.pipeline_mode<synchronous>, transform_indices = @transform_4, window_bounds = array<i64: 8, 1>}, {pipeline_mode = #tpu.pipeline_mode<synchronous>, transform_indices = @transform_5, window_bounds = array<i64: 8, 9>}, {pipeline_mode = #tpu.pipeline_mode<synchronous>, transform_indices = @transform_6, window_bounds = array<i64: 8, 1>}, {pipeline_mode = #tpu.pipeline_mode<synchronous>, transform_indices = @transform_7, window_bounds = array<i64: 8, 4>}, {pipeline_mode = #tpu.pipeline_mode<synchronous>, transform_indices = @transform_8, window_bounds = array<i64: 8, 1>}, {transform_indices = @transform_9, window_bounds = array<i64: 1, 8, 256>}]} {
    %c0 = arith.constant 0 : index
    %c0_0 = arith.constant 0 : index
    %c0_1 = arith.constant 0 : index
    %0 = vector.load %arg1[%c0, %c0_0, %c0_1] : memref<1x4x256xf32, #tpu.memory_space<vmem>>, vector<1x4x256xf32>
    %1 = vector.shape_cast %0 : vector<1x4x256xf32> to vector<4x256xf32>
    %2 = tpu.iota {dimensions = array<i32: 1>} : vector<1x256xi32>
    %c16_i32 = arith.constant 16 : i32
    %c0_i32 = arith.constant 0 : i32
    %3 = arith.cmpi eq, %c16_i32, %c0_i32 : i32
    %c1_i32 = arith.constant 1 : i32
    %4 = arith.select %3, %c1_i32, %c16_i32 : i32
    %5 = vector.broadcast %4 : i32 to vector<1x256xi32>
    %6 = arith.remsi %2, %5 : vector<1x256xi32>
    %c0_i32_2 = arith.constant 0 : i32
    %7 = vector.broadcast %c0_i32_2 : i32 to vector<1x256xi32>
    %8 = arith.cmpi ne, %6, %7 : vector<1x256xi32>
    %c0_i32_3 = arith.constant 0 : i32
    %9 = vector.broadcast %c0_i32_3 : i32 to vector<1x256xi32>
    %10 = arith.cmpi slt, %6, %9 : vector<1x256xi32>
    %c0_i32_4 = arith.constant 0 : i32
    %11 = arith.cmpi slt, %4, %c0_i32_4 : i32
    %12 = vector.broadcast %11 : i1 to vector<1x256xi1>
    %13 = vector.broadcast %12 : vector<1x256xi1> to vector<1x256xi1>
    %14 = arith.xori %10, %13 : vector<1x256xi1>
    %15 = arith.andi %14, %8 : vector<1x256xi1>
    %16 = vector.broadcast %4 : i32 to vector<1x256xi32>
    %17 = arith.addi %6, %16 : vector<1x256xi32>
    %18 = arith.select %15, %17, %6 : vector<1x256xi1>, vector<1x256xi32>
    %c0_i32_5 = arith.constant 0 : i32
    %19 = vector.broadcast %c0_i32_5 : i32 to vector<1x256xi32>
    %20 = arith.cmpi ne, %18, %19 : vector<1x256xi32>
    %21 = arith.extui %20 : vector<1x256xi1> to vector<1x256xi32>
    %22 = arith.sitofp %21 : vector<1x256xi32> to vector<1x256xf32>
    %c15_i32 = arith.constant 15 : i32
    %23 = vector.broadcast %c15_i32 : i32 to vector<1x256xi32>
    %24 = arith.cmpi ne, %18, %23 : vector<1x256xi32>
    %25 = arith.extui %24 : vector<1x256xi1> to vector<1x256xi32>
    %26 = arith.sitofp %25 : vector<1x256xi32> to vector<1x256xf32>
    %c0_6 = arith.constant 0 : index
    %c0_7 = arith.constant 0 : index
    %27 = vector.load %arg2[%c0_6, %c0_7] : memref<4x9xf32, #tpu.memory_space<vmem>>, vector<4x9xf32>
    %c0_8 = arith.constant 0 : index
    %c0_9 = arith.constant 0 : index
    %28 = vector.load %arg3[%c0_8, %c0_9] : memref<4x1xf32, #tpu.memory_space<vmem>>, vector<4x1xf32>
    %cst = arith.constant 0.000000e+00 : f32
    %29 = vector.broadcast %cst : f32 to vector<4x17xf32>
    %cst_10 = arith.constant 0.000000e+00 : f32
    %30 = vector.broadcast %cst_10 : f32 to vector<4x256xf32>
    %31 = vector.extract_strided_slice %1 {offsets = [0, 0], sizes = [4, 239], strides = [1, 1]} : vector<4x256xf32> to vector<4x239xf32>
    %32 = tpu.concatenate %29, %31 in 1 : vector<4x17xf32>, vector<4x239xf32> -> vector<4x256xf32>
    %33 = vector.broadcast %22 : vector<1x256xf32> to vector<4x256xf32>
    %34 = arith.mulf %32, %33 : vector<4x256xf32>
    %35 = vector.extract_strided_slice %27 {offsets = [0, 0], sizes = [4, 1], strides = [1, 1]} : vector<4x9xf32> to vector<4x1xf32>
    %36 = vector.broadcast %35 : vector<4x1xf32> to vector<4x256xf32>
    %37 = arith.mulf %34, %36 : vector<4x256xf32>
    %38 = arith.addf %30, %37 : vector<4x256xf32>
    %39 = vector.extract_strided_slice %29 {offsets = [0, 0], sizes = [4, 16], strides = [1, 1]} : vector<4x17xf32> to vector<4x16xf32>
    %40 = vector.extract_strided_slice %1 {offsets = [0, 0], sizes = [4, 240], strides = [1, 1]} : vector<4x256xf32> to vector<4x240xf32>
    %41 = tpu.concatenate %39, %40 in 1 : vector<4x16xf32>, vector<4x240xf32> -> vector<4x256xf32>
    %42 = vector.extract_strided_slice %27 {offsets = [0, 1], sizes = [4, 1], strides = [1, 1]} : vector<4x9xf32> to vector<4x1xf32>
    %43 = vector.broadcast %42 : vector<4x1xf32> to vector<4x256xf32>
    %44 = arith.mulf %41, %43 : vector<4x256xf32>
    %45 = arith.addf %38, %44 : vector<4x256xf32>
    %46 = vector.extract_strided_slice %29 {offsets = [0, 0], sizes = [4, 15], strides = [1, 1]} : vector<4x17xf32> to vector<4x15xf32>
    %47 = vector.extract_strided_slice %1 {offsets = [0, 0], sizes = [4, 241], strides = [1, 1]} : vector<4x256xf32> to vector<4x241xf32>
    %48 = tpu.concatenate %46, %47 in 1 : vector<4x15xf32>, vector<4x241xf32> -> vector<4x256xf32>
    %49 = vector.broadcast %26 : vector<1x256xf32> to vector<4x256xf32>
    %50 = arith.mulf %48, %49 : vector<4x256xf32>
    %51 = vector.extract_strided_slice %27 {offsets = [0, 2], sizes = [4, 1], strides = [1, 1]} : vector<4x9xf32> to vector<4x1xf32>
    %52 = vector.broadcast %51 : vector<4x1xf32> to vector<4x256xf32>
    %53 = arith.mulf %50, %52 : vector<4x256xf32>
    %54 = arith.addf %45, %53 : vector<4x256xf32>
    %55 = vector.extract_strided_slice %29 {offsets = [0, 0], sizes = [4, 1], strides = [1, 1]} : vector<4x17xf32> to vector<4x1xf32>
    %56 = vector.extract_strided_slice %1 {offsets = [0, 0], sizes = [4, 255], strides = [1, 1]} : vector<4x256xf32> to vector<4x255xf32>
    %57 = tpu.concatenate %55, %56 in 1 : vector<4x1xf32>, vector<4x255xf32> -> vector<4x256xf32>
    %58 = vector.broadcast %22 : vector<1x256xf32> to vector<4x256xf32>
    %59 = arith.mulf %57, %58 : vector<4x256xf32>
    %60 = vector.extract_strided_slice %27 {offsets = [0, 3], sizes = [4, 1], strides = [1, 1]} : vector<4x9xf32> to vector<4x1xf32>
    %61 = vector.broadcast %60 : vector<4x1xf32> to vector<4x256xf32>
    %62 = arith.mulf %59, %61 : vector<4x256xf32>
    %63 = arith.addf %54, %62 : vector<4x256xf32>
    %64 = vector.extract_strided_slice %27 {offsets = [0, 4], sizes = [4, 1], strides = [1, 1]} : vector<4x9xf32> to vector<4x1xf32>
    %65 = vector.broadcast %64 : vector<4x1xf32> to vector<4x256xf32>
    %66 = arith.mulf %1, %65 : vector<4x256xf32>
    %67 = arith.addf %63, %66 : vector<4x256xf32>
    %68 = vector.extract_strided_slice %1 {offsets = [0, 1], sizes = [4, 255], strides = [1, 1]} : vector<4x256xf32> to vector<4x255xf32>
    %69 = vector.extract_strided_slice %29 {offsets = [0, 0], sizes = [4, 1], strides = [1, 1]} : vector<4x17xf32> to vector<4x1xf32>
    %70 = tpu.concatenate %68, %69 in 1 : vector<4x255xf32>, vector<4x1xf32> -> vector<4x256xf32>
    %71 = vector.broadcast %26 : vector<1x256xf32> to vector<4x256xf32>
    %72 = arith.mulf %70, %71 : vector<4x256xf32>
    %73 = vector.extract_strided_slice %27 {offsets = [0, 5], sizes = [4, 1], strides = [1, 1]} : vector<4x9xf32> to vector<4x1xf32>
    %74 = vector.broadcast %73 : vector<4x1xf32> to vector<4x256xf32>
    %75 = arith.mulf %72, %74 : vector<4x256xf32>
    %76 = arith.addf %67, %75 : vector<4x256xf32>
    %77 = vector.extract_strided_slice %1 {offsets = [0, 15], sizes = [4, 241], strides = [1, 1]} : vector<4x256xf32> to vector<4x241xf32>
    %78 = vector.extract_strided_slice %29 {offsets = [0, 0], sizes = [4, 15], strides = [1, 1]} : vector<4x17xf32> to vector<4x15xf32>
    %79 = tpu.concatenate %77, %78 in 1 : vector<4x241xf32>, vector<4x15xf32> -> vector<4x256xf32>
    %80 = vector.broadcast %22 : vector<1x256xf32> to vector<4x256xf32>
    %81 = arith.mulf %79, %80 : vector<4x256xf32>
    %82 = vector.extract_strided_slice %27 {offsets = [0, 6], sizes = [4, 1], strides = [1, 1]} : vector<4x9xf32> to vector<4x1xf32>
    %83 = vector.broadcast %82 : vector<4x1xf32> to vector<4x256xf32>
    %84 = arith.mulf %81, %83 : vector<4x256xf32>
    %85 = arith.addf %76, %84 : vector<4x256xf32>
    %86 = vector.extract_strided_slice %1 {offsets = [0, 16], sizes = [4, 240], strides = [1, 1]} : vector<4x256xf32> to vector<4x240xf32>
    %87 = vector.extract_strided_slice %29 {offsets = [0, 0], sizes = [4, 16], strides = [1, 1]} : vector<4x17xf32> to vector<4x16xf32>
    %88 = tpu.concatenate %86, %87 in 1 : vector<4x240xf32>, vector<4x16xf32> -> vector<4x256xf32>
    %89 = vector.extract_strided_slice %27 {offsets = [0, 7], sizes = [4, 1], strides = [1, 1]} : vector<4x9xf32> to vector<4x1xf32>
    %90 = vector.broadcast %89 : vector<4x1xf32> to vector<4x256xf32>
    %91 = arith.mulf %88, %90 : vector<4x256xf32>
    %92 = arith.addf %85, %91 : vector<4x256xf32>
    %93 = vector.extract_strided_slice %1 {offsets = [0, 17], sizes = [4, 239], strides = [1, 1]} : vector<4x256xf32> to vector<4x239xf32>
    %94 = tpu.concatenate %93, %29 in 1 : vector<4x239xf32>, vector<4x17xf32> -> vector<4x256xf32>
    %95 = vector.broadcast %26 : vector<1x256xf32> to vector<4x256xf32>
    %96 = arith.mulf %94, %95 : vector<4x256xf32>
    %97 = vector.extract_strided_slice %27 {offsets = [0, 8], sizes = [4, 1], strides = [1, 1]} : vector<4x9xf32> to vector<4x1xf32>
    %98 = vector.broadcast %97 : vector<4x1xf32> to vector<4x256xf32>
    %99 = arith.mulf %96, %98 : vector<4x256xf32>
    %100 = arith.addf %92, %99 : vector<4x256xf32>
    %101 = vector.broadcast %28 : vector<4x1xf32> to vector<4x256xf32>
    %102 = arith.addf %100, %101 : vector<4x256xf32>
    %cst_11 = arith.constant 0.000000e+00 : f32
    %103 = vector.broadcast %cst_11 : f32 to vector<4x256xf32>
    %104 = arith.maximumf %102, %103 : vector<4x256xf32>
    %c0_12 = arith.constant 0 : index
    %c0_13 = arith.constant 0 : index
    %105 = vector.load %arg4[%c0_12, %c0_13] : memref<8x4xf32, #tpu.memory_space<vmem>>, vector<8x4xf32>
    %cst_14 = arith.constant dense<0.000000e+00> : vector<8x256xf32>
    %106 = tpu.matmul %105, %104, %cst_14 {dimension_numbers = #tpu.dot_dimension_numbers<[1], [0], [0], [1], [0, 0, 1, 1], [], []>} : vector<8x4xf32>, vector<4x256xf32>, vector<8x256xf32> -> vector<8x256xf32>
    %c0_15 = arith.constant 0 : index
    %c0_16 = arith.constant 0 : index
    %107 = vector.load %arg5[%c0_15, %c0_16] : memref<8x1xf32, #tpu.memory_space<vmem>>, vector<8x1xf32>
    %108 = vector.broadcast %107 : vector<8x1xf32> to vector<8x256xf32>
    %109 = arith.addf %106, %108 : vector<8x256xf32>
    %c0_17 = arith.constant 0 : index
    %c0_18 = arith.constant 0 : index
    %110 = vector.load %arg6[%c0_17, %c0_18] : memref<8x9xf32, #tpu.memory_space<vmem>>, vector<8x9xf32>
    %c0_19 = arith.constant 0 : index
    %c0_20 = arith.constant 0 : index
    %111 = vector.load %arg7[%c0_19, %c0_20] : memref<8x1xf32, #tpu.memory_space<vmem>>, vector<8x1xf32>
    %cst_21 = arith.constant 0.000000e+00 : f32
    %112 = vector.broadcast %cst_21 : f32 to vector<8x17xf32>
    %cst_22 = arith.constant 0.000000e+00 : f32
    %113 = vector.broadcast %cst_22 : f32 to vector<8x256xf32>
    %114 = vector.extract_strided_slice %109 {offsets = [0, 0], sizes = [8, 239], strides = [1, 1]} : vector<8x256xf32> to vector<8x239xf32>
    %115 = tpu.concatenate %112, %114 in 1 : vector<8x17xf32>, vector<8x239xf32> -> vector<8x256xf32>
    %116 = vector.broadcast %22 : vector<1x256xf32> to vector<8x256xf32>
    %117 = arith.mulf %115, %116 : vector<8x256xf32>
    %118 = vector.extract_strided_slice %110 {offsets = [0, 0], sizes = [8, 1], strides = [1, 1]} : vector<8x9xf32> to vector<8x1xf32>
    %119 = vector.broadcast %118 : vector<8x1xf32> to vector<8x256xf32>
    %120 = arith.mulf %117, %119 : vector<8x256xf32>
    %121 = arith.addf %113, %120 : vector<8x256xf32>
    %122 = vector.extract_strided_slice %112 {offsets = [0, 0], sizes = [8, 16], strides = [1, 1]} : vector<8x17xf32> to vector<8x16xf32>
    %123 = vector.extract_strided_slice %109 {offsets = [0, 0], sizes = [8, 240], strides = [1, 1]} : vector<8x256xf32> to vector<8x240xf32>
    %124 = tpu.concatenate %122, %123 in 1 : vector<8x16xf32>, vector<8x240xf32> -> vector<8x256xf32>
    %125 = vector.extract_strided_slice %110 {offsets = [0, 1], sizes = [8, 1], strides = [1, 1]} : vector<8x9xf32> to vector<8x1xf32>
    %126 = vector.broadcast %125 : vector<8x1xf32> to vector<8x256xf32>
    %127 = arith.mulf %124, %126 : vector<8x256xf32>
    %128 = arith.addf %121, %127 : vector<8x256xf32>
    %129 = vector.extract_strided_slice %112 {offsets = [0, 0], sizes = [8, 15], strides = [1, 1]} : vector<8x17xf32> to vector<8x15xf32>
    %130 = vector.extract_strided_slice %109 {offsets = [0, 0], sizes = [8, 241], strides = [1, 1]} : vector<8x256xf32> to vector<8x241xf32>
    %131 = tpu.concatenate %129, %130 in 1 : vector<8x15xf32>, vector<8x241xf32> -> vector<8x256xf32>
    %132 = vector.broadcast %26 : vector<1x256xf32> to vector<8x256xf32>
    %133 = arith.mulf %131, %132 : vector<8x256xf32>
    %134 = vector.extract_strided_slice %110 {offsets = [0, 2], sizes = [8, 1], strides = [1, 1]} : vector<8x9xf32> to vector<8x1xf32>
    %135 = vector.broadcast %134 : vector<8x1xf32> to vector<8x256xf32>
    %136 = arith.mulf %133, %135 : vector<8x256xf32>
    %137 = arith.addf %128, %136 : vector<8x256xf32>
    %138 = vector.extract_strided_slice %112 {offsets = [0, 0], sizes = [8, 1], strides = [1, 1]} : vector<8x17xf32> to vector<8x1xf32>
    %139 = vector.extract_strided_slice %109 {offsets = [0, 0], sizes = [8, 255], strides = [1, 1]} : vector<8x256xf32> to vector<8x255xf32>
    %140 = tpu.concatenate %138, %139 in 1 : vector<8x1xf32>, vector<8x255xf32> -> vector<8x256xf32>
    %141 = vector.broadcast %22 : vector<1x256xf32> to vector<8x256xf32>
    %142 = arith.mulf %140, %141 : vector<8x256xf32>
    %143 = vector.extract_strided_slice %110 {offsets = [0, 3], sizes = [8, 1], strides = [1, 1]} : vector<8x9xf32> to vector<8x1xf32>
    %144 = vector.broadcast %143 : vector<8x1xf32> to vector<8x256xf32>
    %145 = arith.mulf %142, %144 : vector<8x256xf32>
    %146 = arith.addf %137, %145 : vector<8x256xf32>
    %147 = vector.extract_strided_slice %110 {offsets = [0, 4], sizes = [8, 1], strides = [1, 1]} : vector<8x9xf32> to vector<8x1xf32>
    %148 = vector.broadcast %147 : vector<8x1xf32> to vector<8x256xf32>
    %149 = arith.mulf %109, %148 : vector<8x256xf32>
    %150 = arith.addf %146, %149 : vector<8x256xf32>
    %151 = vector.extract_strided_slice %109 {offsets = [0, 1], sizes = [8, 255], strides = [1, 1]} : vector<8x256xf32> to vector<8x255xf32>
    %152 = vector.extract_strided_slice %112 {offsets = [0, 0], sizes = [8, 1], strides = [1, 1]} : vector<8x17xf32> to vector<8x1xf32>
    %153 = tpu.concatenate %151, %152 in 1 : vector<8x255xf32>, vector<8x1xf32> -> vector<8x256xf32>
    %154 = vector.broadcast %26 : vector<1x256xf32> to vector<8x256xf32>
    %155 = arith.mulf %153, %154 : vector<8x256xf32>
    %156 = vector.extract_strided_slice %110 {offsets = [0, 5], sizes = [8, 1], strides = [1, 1]} : vector<8x9xf32> to vector<8x1xf32>
    %157 = vector.broadcast %156 : vector<8x1xf32> to vector<8x256xf32>
    %158 = arith.mulf %155, %157 : vector<8x256xf32>
    %159 = arith.addf %150, %158 : vector<8x256xf32>
    %160 = vector.extract_strided_slice %109 {offsets = [0, 15], sizes = [8, 241], strides = [1, 1]} : vector<8x256xf32> to vector<8x241xf32>
    %161 = vector.extract_strided_slice %112 {offsets = [0, 0], sizes = [8, 15], strides = [1, 1]} : vector<8x17xf32> to vector<8x15xf32>
    %162 = tpu.concatenate %160, %161 in 1 : vector<8x241xf32>, vector<8x15xf32> -> vector<8x256xf32>
    %163 = vector.broadcast %22 : vector<1x256xf32> to vector<8x256xf32>
    %164 = arith.mulf %162, %163 : vector<8x256xf32>
    %165 = vector.extract_strided_slice %110 {offsets = [0, 6], sizes = [8, 1], strides = [1, 1]} : vector<8x9xf32> to vector<8x1xf32>
    %166 = vector.broadcast %165 : vector<8x1xf32> to vector<8x256xf32>
    %167 = arith.mulf %164, %166 : vector<8x256xf32>
    %168 = arith.addf %159, %167 : vector<8x256xf32>
    %169 = vector.extract_strided_slice %109 {offsets = [0, 16], sizes = [8, 240], strides = [1, 1]} : vector<8x256xf32> to vector<8x240xf32>
    %170 = vector.extract_strided_slice %112 {offsets = [0, 0], sizes = [8, 16], strides = [1, 1]} : vector<8x17xf32> to vector<8x16xf32>
    %171 = tpu.concatenate %169, %170 in 1 : vector<8x240xf32>, vector<8x16xf32> -> vector<8x256xf32>
    %172 = vector.extract_strided_slice %110 {offsets = [0, 7], sizes = [8, 1], strides = [1, 1]} : vector<8x9xf32> to vector<8x1xf32>
    %173 = vector.broadcast %172 : vector<8x1xf32> to vector<8x256xf32>
    %174 = arith.mulf %171, %173 : vector<8x256xf32>
    %175 = arith.addf %168, %174 : vector<8x256xf32>
    %176 = vector.extract_strided_slice %109 {offsets = [0, 17], sizes = [8, 239], strides = [1, 1]} : vector<8x256xf32> to vector<8x239xf32>
    %177 = tpu.concatenate %176, %112 in 1 : vector<8x239xf32>, vector<8x17xf32> -> vector<8x256xf32>
    %178 = vector.broadcast %26 : vector<1x256xf32> to vector<8x256xf32>
    %179 = arith.mulf %177, %178 : vector<8x256xf32>
    %180 = vector.extract_strided_slice %110 {offsets = [0, 8], sizes = [8, 1], strides = [1, 1]} : vector<8x9xf32> to vector<8x1xf32>
    %181 = vector.broadcast %180 : vector<8x1xf32> to vector<8x256xf32>
    %182 = arith.mulf %179, %181 : vector<8x256xf32>
    %183 = arith.addf %175, %182 : vector<8x256xf32>
    %184 = vector.broadcast %111 : vector<8x1xf32> to vector<8x256xf32>
    %185 = arith.addf %183, %184 : vector<8x256xf32>
    %c0_23 = arith.constant 0 : index
    %c0_24 = arith.constant 0 : index
    %186 = vector.load %arg8[%c0_23, %c0_24] : memref<8x4xf32, #tpu.memory_space<vmem>>, vector<8x4xf32>
    %cst_25 = arith.constant dense<0.000000e+00> : vector<8x256xf32>
    %187 = tpu.matmul %186, %1, %cst_25 {dimension_numbers = #tpu.dot_dimension_numbers<[1], [0], [0], [1], [0, 0, 1, 1], [], []>} : vector<8x4xf32>, vector<4x256xf32>, vector<8x256xf32> -> vector<8x256xf32>
    %c0_26 = arith.constant 0 : index
    %c0_27 = arith.constant 0 : index
    %188 = vector.load %arg9[%c0_26, %c0_27] : memref<8x1xf32, #tpu.memory_space<vmem>>, vector<8x1xf32>
    %189 = vector.broadcast %188 : vector<8x1xf32> to vector<8x256xf32>
    %190 = arith.addf %187, %189 : vector<8x256xf32>
    %191 = arith.addf %190, %185 : vector<8x256xf32>
    %cst_28 = arith.constant 0.000000e+00 : f32
    %192 = vector.broadcast %cst_28 : f32 to vector<8x256xf32>
    %193 = arith.maximumf %191, %192 : vector<8x256xf32>
    %c0_29 = arith.constant 0 : index
    %c0_30 = arith.constant 0 : index
    %c0_31 = arith.constant 0 : index
    %194 = vector.load %arg10[%c0_29, %c0_30, %c0_31] : memref<1x8x256xf32, #tpu.memory_space<vmem>>, vector<1x8x256xf32>
    %195 = vector.shape_cast %194 : vector<1x8x256xf32> to vector<8x256xf32>
    %196 = vector.shape_cast %193 : vector<8x256xf32> to vector<1x8x256xf32>
    tpu.vector_store %arg10[%c0_29, %c0_30, %c0_31], %196 {strides = array<i32>} : memref<1x8x256xf32, #tpu.memory_space<vmem>>, vector<1x8x256xf32>,
    return
  }
  func.func @transform_0(%arg0: i32) -> (i32, i32, i32) {
    %c0_i32 = arith.constant 0 : i32
    %c0_i32_0 = arith.constant 0 : i32
    %c0_i32_1 = arith.constant 0 : i32
    return %arg0, %c0_i32, %c0_i32_0 : i32, i32, i32
  }
  func.func @transform_1(%arg0: i32) -> (i32, i32) {
    %c0_i32 = arith.constant 0 : i32
    %c0_i32_0 = arith.constant 0 : i32
    %c0_i32_1 = arith.constant 0 : i32
    return %c0_i32, %c0_i32_0 : i32, i32
  }
  func.func @transform_2(%arg0: i32) -> (i32, i32) {
    %c0_i32 = arith.constant 0 : i32
    %c0_i32_0 = arith.constant 0 : i32
    %c0_i32_1 = arith.constant 0 : i32
    return %c0_i32, %c0_i32_0 : i32, i32
  }
  func.func @transform_3(%arg0: i32) -> (i32, i32) {
    %c0_i32 = arith.constant 0 : i32
    %c0_i32_0 = arith.constant 0 : i32
    %c0_i32_1 = arith.constant 0 : i32
    return %c0_i32, %c0_i32_0 : i32, i32
  }
  func.func @transform_4(%arg0: i32) -> (i32, i32) {
    %c0_i32 = arith.constant 0 : i32
    %c0_i32_0 = arith.constant 0 : i32
    %c0_i32_1 = arith.constant 0 : i32
    return %c0_i32, %c0_i32_0 : i32, i32
  }
  func.func @transform_5(%arg0: i32) -> (i32, i32) {
    %c0_i32 = arith.constant 0 : i32
    %c0_i32_0 = arith.constant 0 : i32
    %c0_i32_1 = arith.constant 0 : i32
    return %c0_i32, %c0_i32_0 : i32, i32
  }
  func.func @transform_6(%arg0: i32) -> (i32, i32) {
    %c0_i32 = arith.constant 0 : i32
    %c0_i32_0 = arith.constant 0 : i32
    %c0_i32_1 = arith.constant 0 : i32
    return %c0_i32, %c0_i32_0 : i32, i32
  }
  func.func @transform_7(%arg0: i32) -> (i32, i32) {
    %c0_i32 = arith.constant 0 : i32
    %c0_i32_0 = arith.constant 0 : i32
    %c0_i32_1 = arith.constant 0 : i32
    return %c0_i32, %c0_i32_0 : i32, i32
  }
  func.func @transform_8(%arg0: i32) -> (i32, i32) {
    %c0_i32 = arith.constant 0 : i32
    %c0_i32_0 = arith.constant 0 : i32
    %c0_i32_1 = arith.constant 0 : i32
    return %c0_i32, %c0_i32_0 : i32, i32
  }
  func.func @transform_9(%arg0: i32) -> (i32, i32, i32) {
    %c0_i32 = arith.constant 0 : i32
    %c0_i32_0 = arith.constant 0 : i32
    %c0_i32_1 = arith.constant 0 : i32
    return %arg0, %c0_i32, %c0_i32_0 : i32, i32, i32
  }
}

</mosaic_0001>

<llo_original>
// kernel: tpu_custom_call.1
$region0: #{tpu_custom_call.1}
  #allocation0 [shape = 'u32[]', space=smem, size = 0x4, offset = 0x4, fixed_abs, tag = 'smem constant byte address 0x4 - core index']
  #allocation1 [shape = 'u32[144,128]{1,0:T(1,128)}', space=vmem, size = 0x12000, scoped, tag = 'internal scratch']
  %s0 = inlined_call_operand.vmem [shape: f32[2,4,256], index: 0, kind: input, shape index: {}]
  %s1 = inlined_call_operand.vmem [shape: f32[4,9], index: 1, kind: input, shape index: {}]
  %s2 = inlined_call_operand.vmem [shape: f32[4,1], index: 2, kind: input, shape index: {}]
  %s3 = inlined_call_operand.vmem [shape: f32[8,4], index: 3, kind: input, shape index: {}]
  %s4 = inlined_call_operand.vmem [shape: f32[8,1], index: 4, kind: input, shape index: {}]
  %s5 = inlined_call_operand.vmem [shape: f32[8,9], index: 5, kind: input, shape index: {}]
  %s6 = inlined_call_operand.vmem [shape: f32[8,1], index: 6, kind: input, shape index: {}]
  %s7 = inlined_call_operand.vmem [shape: f32[8,4], index: 7, kind: input, shape index: {}]
  %s8 = inlined_call_operand.vmem [shape: f32[8,1], index: 8, kind: input, shape index: {}]
  %s9 = inlined_call_operand.hbm [shape: f32[2,8,256], index: 9, kind: output, shape index: {}]
  %s10 = sld [smem:[#allocation0]]
  $region69: #{tpu_custom_call.1} parent=0
    _
  %s12 = ssub.s32 1, %s10
  %s13 = scalar_select 0, %s12, %s10
  $region1: #{tpu_custom_call.1} parent=0
    #allocation2 [shape = 'u8[16384]{0}', space=vmem, size = 0x4000, scoped, tag = 'output window, operand 0']
    #allocation3 [shape = 's32[2]{0}', space=sflag, size = 0x8, scoped, tag = 'scoped memory for tpu_custom_call.1']
    %14 = vsyncpa [#allocation3], 0
    %s15 = scalar_lea.sflag [#allocation3], 1
    %16 = vsyncpa %s15, 0
    loop: start=0, step=1, limit=4
    $region2: #{tpu_custom_call.1} parent=1 // loop_pre_header
      _
    $region3: #{tpu_custom_call.1} parent=1 // loop_header
      %s18 = sphi 0, %s22
      %p19 = scmp.ge.s32.totalorder %s18, 4
      %s28 = sphi 0, %s30
      %s31 = sphi 0, %s28
      %s32 = sphi 0, %s31
      %s48 = sphi 0, %s32
      %s52 = sphi 0, %s52
      %s54 = sphi 0, %s52
      %s55 = sphi 0, %s54
      %s69 = sphi 0, %s55
      %s73 = sphi 0, %s73
      %s75 = sphi 0, %s73
      %s76 = sphi 0, %s75
      %s90 = sphi 0, %s76
      %s94 = sphi 0, %s94
      %s96 = sphi 0, %s94
      %s97 = sphi 0, %s96
      %s111 = sphi 0, %s97
      %s115 = sphi 0, %s115
      %s117 = sphi 0, %s115
      %s118 = sphi 0, %s117
      %s132 = sphi 0, %s118
      %s136 = sphi 0, %s136
      %s138 = sphi 0, %s136
      %s139 = sphi 0, %s138
      %s153 = sphi 0, %s139
      %s157 = sphi 0, %s157
      %s159 = sphi 0, %s157
      %s160 = sphi 0, %s159
      %s174 = sphi 0, %s160
      %s178 = sphi 0, %s178
      %s180 = sphi 0, %s178
      %s181 = sphi 0, %s180
      %s195 = sphi 0, %s181
      %s199 = sphi 0, %s199
      %s201 = sphi 0, %s199
      %s202 = sphi 0, %s201
      %s216 = sphi 0, %s202
      %s222 = sphi 0, %s224
      %s225 = sphi 0, %s222
      %s226 = sphi 0, %s225
      %s242 = sphi 0, %s226
    $region4: #{tpu_custom_call.1} parent=1 // loop_header_branch
      %21 = sbr.rel (%p19) target = $region8
    $region5: #{tpu_custom_call.1} parent=1 // loop_body
      %s23 = ssub.s32 %s18, 1
      %s24 = ssub.s32 %s18, 2
      %s25 = sadd.s32 %s18, 1
      %s26 = ssub.s32 %s18, %s25
      %p27 = scmp.eq.s32.totalorder %s26, 0
      %s29 = sadd.s32 %s28, 1
      %s30 = scalar_select %p27, %s28, %s29
      %p33 = pneg %p27
      %p34 = scmp.eq.s32.totalorder %s18, 1
      %p35 = por %p33, %p34
      %p36 = scmp.ne.s32.totalorder %s28, %s31
      %p37 = scmp.eq.s32.totalorder %s18, 0
      %p38 = por %p36, %p37
      %p39 = scmp.ne.s32.totalorder %s28, %s31
      %p40 = scmp.eq.s32.totalorder %s23, 1
      %p41 = por %p39, %p40
      %p42 = scmp.ne.s32.totalorder %s31, %s32
      %p43 = scmp.eq.s32.totalorder %s23, 0
      %p44 = por %p42, %p43
      %p45 = scmp.ne.s32.totalorder %s31, %s32
      %p46 = scmp.eq.s32.totalorder %s24, 1
      %p47 = por %p45, %p46
      %p49 = scmp.ne.s32.totalorder %s32, %s48
      %p50 = scmp.eq.s32.totalorder %s24, 0
      %p51 = por %p49, %p50
      %s53 = sadd.s32 %s52, 1
      %p56 = scmp.eq.s32.totalorder %s18, 1
      %p57 = scmp.ne.s32.totalorder %s52, %s54
      %p58 = scmp.eq.s32.totalorder %s18, 0
      %p59 = por %p57, %p58
      %p60 = scmp.ne.s32.totalorder %s52, %s54
      %p61 = scmp.eq.s32.totalorder %s23, 1
      %p62 = por %p60, %p61
      %p63 = scmp.ne.s32.totalorder %s54, %s55
      %p64 = scmp.eq.s32.totalorder %s23, 0
      %p65 = por %p63, %p64
      %p66 = scmp.ne.s32.totalorder %s54, %s55
      %p67 = scmp.eq.s32.totalorder %s24, 1
      %p68 = por %p66, %p67
      %p70 = scmp.ne.s32.totalorder %s55, %s69
      %p71 = scmp.eq.s32.totalorder %s24, 0
      %p72 = por %p70, %p71
      %s74 = sadd.s32 %s73, 1
      %p77 = scmp.eq.s32.totalorder %s18, 1
      %p78 = scmp.ne.s32.totalorder %s73, %s75
      %p79 = scmp.eq.s32.totalorder %s18, 0
      %p80 = por %p78, %p79
      %p81 = scmp.ne.s32.totalorder %s73, %s75
      %p82 = scmp.eq.s32.totalorder %s23, 1
      %p83 = por %p81, %p82
      %p84 = scmp.ne.s32.totalorder %s75, %s76
      %p85 = scmp.eq.s32.totalorder %s23, 0
      %p86 = por %p84, %p85
      %p87 = scmp.ne.s32.totalorder %s75, %s76
      %p88 = scmp.eq.s32.totalorder %s24, 1
      %p89 = por %p87, %p88
      %p91 = scmp.ne.s32.totalorder %s76, %s90
      %p92 = scmp.eq.s32.totalorder %s24, 0
      %p93 = por %p91, %p92
      %s95 = sadd.s32 %s94, 1
      %p98 = scmp.eq.s32.totalorder %s18, 1
      %p99 = scmp.ne.s32.totalorder %s94, %s96
      %p100 = scmp.eq.s32.totalorder %s18, 0
      %p101 = por %p99, %p100
      %p102 = scmp.ne.s32.totalorder %s94, %s96
      %p103 = scmp.eq.s32.totalorder %s23, 1
      %p104 = por %p102, %p103
      %p105 = scmp.ne.s32.totalorder %s96, %s97
      %p106 = scmp.eq.s32.totalorder %s23, 0
      %p107 = por %p105, %p106
      %p108 = scmp.ne.s32.totalorder %s96, %s97
      %p109 = scmp.eq.s32.totalorder %s24, 1
      %p110 = por %p108, %p109
      %p112 = scmp.ne.s32.totalorder %s97, %s111
      %p113 = scmp.eq.s32.totalorder %s24, 0
      %p114 = por %p112, %p113
      %s116 = sadd.s32 %s115, 1
      %p119 = scmp.eq.s32.totalorder %s18, 1
      %p120 = scmp.ne.s32.totalorder %s115, %s117
      %p121 = scmp.eq.s32.totalorder %s18, 0
      %p122 = por %p120, %p121
      %p123 = scmp.ne.s32.totalorder %s115, %s117
      %p124 = scmp.eq.s32.totalorder %s23, 1
      %p125 = por %p123, %p124
      %p126 = scmp.ne.s32.totalorder %s117, %s118
      %p127 = scmp.eq.s32.totalorder %s23, 0
      %p128 = por %p126, %p127
      %p129 = scmp.ne.s32.totalorder %s117, %s118
      %p130 = scmp.eq.s32.totalorder %s24, 1
      %p131 = por %p129, %p130
      %p133 = scmp.ne.s32.totalorder %s118, %s132
      %p134 = scmp.eq.s32.totalorder %s24, 0
      %p135 = por %p133, %p134
      %s137 = sadd.s32 %s136, 1
      %p140 = scmp.eq.s32.totalorder %s18, 1
      %p141 = scmp.ne.s32.totalorder %s136, %s138
      %p142 = scmp.eq.s32.totalorder %s18, 0
      %p143 = por %p141, %p142
      %p144 = scmp.ne.s32.totalorder %s136, %s138
      %p145 = scmp.eq.s32.totalorder %s23, 1
      %p146 = por %p144, %p145
      %p147 = scmp.ne.s32.totalorder %s138, %s139
      %p148 = scmp.eq.s32.totalorder %s23, 0
      %p149 = por %p147, %p148
      %p150 = scmp.ne.s32.totalorder %s138, %s139
      %p151 = scmp.eq.s32.totalorder %s24, 1
      %p152 = por %p150, %p151
      %p154 = scmp.ne.s32.totalorder %s139, %s153
      %p155 = scmp.eq.s32.totalorder %s24, 0
      %p156 = por %p154, %p155
      %s158 = sadd.s32 %s157, 1
      %p161 = scmp.eq.s32.totalorder %s18, 1
      %p162 = scmp.ne.s32.totalorder %s157, %s159
      %p163 = scmp.eq.s32.totalorder %s18, 0
      %p164 = por %p162, %p163
      %p165 = scmp.ne.s32.totalorder %s157, %s159
      %p166 = scmp.eq.s32.totalorder %s23, 1
      %p167 = por %p165, %p166
      %p168 = scmp.ne.s32.totalorder %s159, %s160
      %p169 = scmp.eq.s32.totalorder %s23, 0
      %p170 = por %p168, %p169
      %p171 = scmp.ne.s32.totalorder %s159, %s160
      %p172 = scmp.eq.s32.totalorder %s24, 1
      %p173 = por %p171, %p172
      %p175 = scmp.ne.s32.totalorder %s160, %s174
      %p176 = scmp.eq.s32.totalorder %s24, 0
      %p177 = por %p175, %p176
      %s179 = sadd.s32 %s178, 1
      %p182 = scmp.eq.s32.totalorder %s18, 1
      %p183 = scmp.ne.s32.totalorder %s178, %s180
      %p184 = scmp.eq.s32.totalorder %s18, 0
      %p185 = por %p183, %p184
      %p186 = scmp.ne.s32.totalorder %s178, %s180
      %p187 = scmp.eq.s32.totalorder %s23, 1
      %p188 = por %p186, %p187
      %p189 = scmp.ne.s32.totalorder %s180, %s181
      %p190 = scmp.eq.s32.totalorder %s23, 0
      %p191 = por %p189, %p190
      %p192 = scmp.ne.s32.totalorder %s180, %s181
      %p193 = scmp.eq.s32.totalorder %s24, 1
      %p194 = por %p192, %p193
      %p196 = scmp.ne.s32.totalorder %s181, %s195
      %p197 = scmp.eq.s32.totalorder %s24, 0
      %p198 = por %p196, %p197
      %s200 = sadd.s32 %s199, 1
      %p203 = scmp.eq.s32.totalorder %s18, 1
      %p204 = scmp.ne.s32.totalorder %s199, %s201
      %p205 = scmp.eq.s32.totalorder %s18, 0
      %p206 = por %p204, %p205
      %p207 = scmp.ne.s32.totalorder %s199, %s201
      %p208 = scmp.eq.s32.totalorder %s23, 1
      %p209 = por %p207, %p208
      %p210 = scmp.ne.s32.totalorder %s201, %s202
      %p211 = scmp.eq.s32.totalorder %s23, 0
      %p212 = por %p210, %p211
      %p213 = scmp.ne.s32.totalorder %s201, %s202
      %p214 = scmp.eq.s32.totalorder %s24, 1
      %p215 = por %p213, %p214
      %p217 = scmp.ne.s32.totalorder %s202, %s216
      %p218 = scmp.eq.s32.totalorder %s24, 0
      %p219 = por %p217, %p218
      %s220 = ssub.s32 %s18, %s25
      %p221 = scmp.eq.s32.totalorder %s220, 0
      %s223 = sadd.s32 %s222, 1
      %s224 = scalar_select %p221, %s222, %s223
      %p227 = pneg %p221
      %p228 = scmp.eq.s32.totalorder %s18, 1
      %p229 = por %p227, %p228
      %p230 = scmp.ne.s32.totalorder %s222, %s225
      %p231 = scmp.eq.s32.totalorder %s18, 0
      %p232 = por %p230, %p231
      %p233 = scmp.ne.s32.totalorder %s222, %s225
      %p234 = scmp.eq.s32.totalorder %s23, 1
      %p235 = por %p233, %p234
      %p236 = scmp.ne.s32.totalorder %s225, %s226
      %p237 = scmp.eq.s32.totalorder %s23, 0
      %p238 = por %p236, %p237
      %p239 = scmp.ne.s32.totalorder %s225, %s226
      %p240 = scmp.eq.s32.totalorder %s24, 1
      %p241 = por %p239, %p240
      %p243 = scmp.ne.s32.totalorder %s226, %s242
      %p244 = scmp.eq.s32.totalorder %s24, 0
      %p245 = por %p243, %p244
      %p246 = scmp.le.s32.totalorder 1, %s18
      %p247 = scmp.lt.s32.totalorder %s18, 3
      %p248 = pnand %p246, %p247
      %p249 = pneg %p248
      // Predicated region
      $region9: #{tpu_custom_call.1} parent=5 // pred_check
        _
      $region10: #{tpu_custom_call.1} parent=5 // pred_check_branch
        %251 = sbr.rel (%p248) target = $region12
      $region11: #{tpu_custom_call.1} parent=5 // pred_region
        %s252 = ssub.s32 %s18, 1
        // Predicated region
        $region13: #{tpu_custom_call.1} parent=11 // pred_check
          %p253 = pneg %p65
        $region14: #{tpu_custom_call.1} parent=11 // pred_check_branch
          %255 = sbr.rel (%p253) target = $region16
        $region15: #{tpu_custom_call.1} parent=11 // pred_region
          _
        $region16: #{tpu_custom_call.1} parent=11 // pred_fallthru
          _
        // Predicated region
        $region17: #{tpu_custom_call.1} parent=11 // pred_check
          %p256 = pneg %p86
        $region18: #{tpu_custom_call.1} parent=11 // pred_check_branch
          %258 = sbr.rel (%p256) target = $region20
        $region19: #{tpu_custom_call.1} parent=11 // pred_region
          _
        $region20: #{tpu_custom_call.1} parent=11 // pred_fallthru
          _
        // Predicated region
        $region21: #{tpu_custom_call.1} parent=11 // pred_check
          %p259 = pneg %p107
        $region22: #{tpu_custom_call.1} parent=11 // pred_check_branch
          %261 = sbr.rel (%p259) target = $region24
        $region23: #{tpu_custom_call.1} parent=11 // pred_region
          _
        $region24: #{tpu_custom_call.1} parent=11 // pred_fallthru
          _
        // Predicated region
        $region25: #{tpu_custom_call.1} parent=11 // pred_check
          %p262 = pneg %p128
        $region26: #{tpu_custom_call.1} parent=11 // pred_check_branch
          %264 = sbr.rel (%p262) target = $region28
        $region27: #{tpu_custom_call.1} parent=11 // pred_region
          _
        $region28: #{tpu_custom_call.1} parent=11 // pred_fallthru
          _
        // Predicated region
        $region29: #{tpu_custom_call.1} parent=11 // pred_check
          %p265 = pneg %p149
        $region30: #{tpu_custom_call.1} parent=11 // pred_check_branch
          %267 = sbr.rel (%p265) target = $region32
        $region31: #{tpu_custom_call.1} parent=11 // pred_region
          _
        $region32: #{tpu_custom_call.1} parent=11 // pred_fallthru
          _
        // Predicated region
        $region33: #{tpu_custom_call.1} parent=11 // pred_check
          %p268 = pneg %p170
        $region34: #{tpu_custom_call.1} parent=11 // pred_check_branch
          %270 = sbr.rel (%p268) target = $region36
        $region35: #{tpu_custom_call.1} parent=11 // pred_region
          _
        $region36: #{tpu_custom_call.1} parent=11 // pred_fallthru
          _
        // Predicated region
        $region37: #{tpu_custom_call.1} parent=11 // pred_check
          %p271 = pneg %p191
        $region38: #{tpu_custom_call.1} parent=11 // pred_check_branch
          %273 = sbr.rel (%p271) target = $region40
        $region39: #{tpu_custom_call.1} parent=11 // pred_region
          _
        $region40: #{tpu_custom_call.1} parent=11 // pred_fallthru
          _
        // Predicated region
        $region41: #{tpu_custom_call.1} parent=11 // pred_check
          %p274 = pneg %p212
        $region42: #{tpu_custom_call.1} parent=11 // pred_check_branch
          %276 = sbr.rel (%p274) target = $region44
        $region43: #{tpu_custom_call.1} parent=11 // pred_region
          _
        $region44: #{tpu_custom_call.1} parent=11 // pred_fallthru
          _
      $region12: #{tpu_custom_call.1} parent=5 // pred_fallthru
        _
      %p277 = scmp.lt.s32.totalorder %s18, 2
      // Predicated region
      $region45: #{tpu_custom_call.1} parent=5 // pred_check
        %p278 = pneg %p277
      $region46: #{tpu_custom_call.1} parent=5 // pred_check_branch
        %280 = sbr.rel (%p278) target = $region48
      $region47: #{tpu_custom_call.1} parent=5 // pred_region
        // Predicated region
        $region49: #{tpu_custom_call.1} parent=47 // pred_check
          %p281 = pneg %p38
        $region50: #{tpu_custom_call.1} parent=47 // pred_check_branch
          %283 = sbr.rel (%p281) target = $region52
        $region51: #{tpu_custom_call.1} parent=47 // pred_region
          %p284 = scmp.lt.s32.totalorder %s18, 1
          %s285 = scalar_select %p284, %s18, 1
          %s286 = smul.addr %s285, 2
          %s287 = smul.addr %s286, 4
          %s288 = scalar_lea.vmem %s0, %s287
        $region52: #{tpu_custom_call.1} parent=47 // pred_fallthru
          _
      $region48: #{tpu_custom_call.1} parent=5 // pred_fallthru
        _
      %p289 = scmp.le.s32.totalorder 1, %s18
      %p290 = scmp.lt.s32.totalorder %s18, 3
      %p291 = pnand %p289, %p290
      %p292 = pneg %p291
      // Predicated region
      $region53: #{tpu_custom_call.1} parent=5 // pred_check
        _
      $region54: #{tpu_custom_call.1} parent=5 // pred_check_branch
        %294 = sbr.rel (%p291) target = $region56
      $region55: #{tpu_custom_call.1} parent=5 // pred_region
        %s295 = ssub.s32 %s18, 1
        %p296 = scmp.lt.s32.totalorder %s23, 1
        %s297 = scalar_select %p296, %s23, 1
        %s298 = smul.addr %s297, 2
        %s299 = smul.addr %s298, 4
        %s300 = scalar_lea.vmem %s0, %s299
        %p301 = pneg %p44
        %p302 = pneg %p41
        %p303 = pneg %p65
        %p304 = pneg %p62
        %p305 = pneg %p86
        %p306 = pneg %p83
        %p307 = pneg %p107
        %p308 = pneg %p104
        %p309 = pneg %p128
        %p310 = pneg %p125
        %p311 = pneg %p149
        %p312 = pneg %p146
        %p313 = pneg %p170
        %p314 = pneg %p167
        %p315 = pneg %p191
        %p316 = pneg %p188
        %p317 = pneg %p212
        %p318 = pneg %p209
        %p319 = pneg %p238
        %p320 = pneg %p235
        %s321 = sand.u32 %s225, 1
        %s322 = scalar_lea.sflag [#allocation3], %s321
        %s323 = sand.u32 %s225, 1
        %s324 = smul.addr %s323, 16
        %s325 = scalar_lea.vmem [#allocation2], %s324
        %p326 = scmp.lt.s32.totalorder %s23, 1
        %s327 = scalar_select %p326, %s23, 1
        %s328 = smul.addr %s327, 2
        %s329 = smul.addr %s328, 4
        %s330 = scalar_lea.vmem %s0, %s329
        %v331 = vld [vmem:[%s330] sm:$0xff]
        %v332 = vlaneseq
        %v333 = vand.u32 %v332, 127
        %v334 = vadd.s32 %v333, 128
        %vm335 = vcmp.lt.s32.totalorder %v333, 0
        %v336 = vsub.s32 0, %v333
        %v337 = vsel %vm335, %v336, %v333
        %v338 = vshrl.u32 %v337, 4
        %v339 = vand.u32 %v337, 15
        %v340 = vsub.s32 0, %v339
        %v341 = vsel %vm335, %v340, %v339
        %vm342 = vcmp.lt.s32.totalorder %v334, 0
        %v343 = vsub.s32 0, %v334
        %v344 = vsel %vm342, %v343, %v334
        %v345 = vshrl.u32 %v344, 4
        %v346 = vand.u32 %v344, 15
        %v347 = vsub.s32 0, %v346
        %v348 = vsel %vm342, %v347, %v346
        %vm349 = vcmp.ne.s32.totalorder %v341, 0
        %vm350 = vcmp.ne.s32.totalorder %v348, 0
        %vm351 = vcmp.lt.s32.totalorder %v341, 0
        %vm352 = vcmp.lt.s32.totalorder %v348, 0
        %vm353 = vmand %vm351, %vm349
        %vm354 = vmand %vm352, %vm350
        %v355 = vadd.s32 %v341, 16
        %v356 = vadd.s32 %v348, 16
        %v357 = vsel %vm353, %v355, %v341
        %v358 = vsel %vm354, %v356, %v348
        %vm359 = vcmp.ne.s32.totalorder %v357, 0
        %vm360 = vcmp.ne.s32.totalorder %v358, 0
        %v361 = vsel %vm359, 1, 0
        %v362 = vsel %vm360, 1, 0
        %v363 = vcvt.s32.f32 %v361
        %v364 = vcvt.s32.f32 %v362
        %vm365 = vcmp.ne.s32.totalorder %v357, 15
        %vm366 = vcmp.ne.s32.totalorder %v358, 15
        %v367 = vsel %vm365, 1, 0
        %v368 = vsel %vm366, 1, 0
        %v369 = vcvt.s32.f32 %v367
        %v370 = vcvt.s32.f32 %v368
        %v371 = vld [vmem:[%s1] sm:$0xf]
        %v372 = vld [vmem:[%s2] sm:$0xf]
        %v374 = vcombine.high %v331, %v331
        %375 = vrot.lane.b32.xlu0 %v331, 17
        %v376 = vpop.permute.xlu0 %375
        %377 = vrot.lane.b32.xlu0 %v374, 17
        %v378 = vpop.permute.xlu0 %377
        %vm379 = vcmask 138240
        %v380 = vsel %vm379, %v376, %v378
        %v383 = vsel %vm379, 0.0, %v376
        %v384 = vmul.f32 %v383, %v363
        %v385 = vmul.f32 %v380, %v364
        %387 = vset.pattern.permute.xlu0 0
        %388 = vperm.xlu0 %387, %v371
        %v389 = vpop.permute.xlu0 %388
        %v391 = vmul.f32 %v384, %v389
        %v392 = vmul.f32 %v385, %v389
        %v393 = vadd.f32 %v391, 0.0
        %v394 = vadd.f32 %v392, 0.0
        %395 = vrot.lane.b32.xlu0 %v331, 16
        %v396 = vpop.permute.xlu0 %395
        %397 = vrot.lane.b32.xlu0 %v374, 16
        %v398 = vpop.permute.xlu0 %397
        %vm399 = vcmask 130048
        %v400 = vsel %vm399, %v396, %v398
        %v403 = vsel %vm399, 0.0, %v396
        %404 = vset.pattern.permute.xlu0 1
        %405 = vperm.xlu0 %404, %v371
        %v406 = vpop.permute.xlu0 %405
        %v408 = vmul.f32 %v403, %v406
        %v409 = vmul.f32 %v400, %v406
        %v410 = vadd.f32 %v393, %v408
        %v411 = vadd.f32 %v394, %v409
        %412 = vrot.lane.b32.xlu0 %v331, 15
        %v413 = vpop.permute.xlu0 %412
        %414 = vrot.lane.b32.xlu0 %v374, 15
        %v415 = vpop.permute.xlu0 %414
        %vm416 = vcmask 121856
        %v417 = vsel %vm416, %v413, %v415
        %v420 = vsel %vm416, 0.0, %v413
        %v421 = vmul.f32 %v420, %v369
        %v422 = vmul.f32 %v417, %v370
        %423 = vset.pattern.permute.xlu0 2
        %424 = vperm.xlu0 %423, %v371
        %v425 = vpop.permute.xlu0 %424
        %v427 = vmul.f32 %v421, %v425
        %v428 = vmul.f32 %v422, %v425
        %v429 = vadd.f32 %v410, %v427
        %v430 = vadd.f32 %v411, %v428
        %431 = vrot.lane.b32.xlu0 %v331, 1
        %v432 = vpop.permute.xlu0 %431
        %433 = vrot.lane.b32.xlu0 %v374, 1
        %v434 = vpop.permute.xlu0 %433
        %vm435 = vcmask 7168
        %v436 = vsel %vm435, %v432, %v434
        %v439 = vsel %vm435, 0.0, %v432
        %v440 = vmul.f32 %v439, %v363
        %v441 = vmul.f32 %v436, %v364
        %442 = vset.pattern.permute.xlu0 3
        %443 = vperm.xlu0 %442, %v371
        %v444 = vpop.permute.xlu0 %443
        %v446 = vmul.f32 %v440, %v444
        %v447 = vmul.f32 %v441, %v444
        %v448 = vadd.f32 %v429, %v446
        %v449 = vadd.f32 %v430, %v447
        %450 = vset.pattern.permute.xlu0 4
        %451 = vperm.xlu0 %450, %v371
        %v452 = vpop.permute.xlu0 %451
        %v454 = vunpack.c.l.s4 839922192
        %v455 = vunpack.c.0.s8 %v454
        %v456 = vlaneseq
        %v457 = vshrl.u32 %v456, 7
        %v458 = vsub.s32 %v455, %v457
        %v459 = vrot.slane %v452, %v458
        %v461 = vmul.f32 %v331, %v459
        %v463 = vcombine.high %v461, %v461
        %v465 = vadd.f32 %v448, %v461
        %v466 = vadd.f32 %v449, %v463
        %467 = vrot.lane.b32.xlu0 %v331, 127
        %v468 = vpop.permute.xlu0 %467
        %469 = vrot.lane.b32.xlu0 %v374, 127
        %v470 = vpop.permute.xlu0 %469
        %vm471 = vcmask 1039360
        %v472 = vsel %vm471, %v468, %v470
        %v475 = vsel %vm471, %v470, 0.0
        %v476 = vmul.f32 %v472, %v369
        %v477 = vmul.f32 %v475, %v370
        %478 = vset.pattern.permute.xlu0 5
        %479 = vperm.xlu0 %478, %v371
        %v480 = vpop.permute.xlu0 %479
        %v482 = vmul.f32 %v476, %v480
        %v483 = vmul.f32 %v477, %v480
        %v484 = vadd.f32 %v465, %v482
        %v485 = vadd.f32 %v466, %v483
        %486 = vrot.lane.b32.xlu0 %v331, 113
        %v487 = vpop.permute.xlu0 %486
        %488 = vrot.lane.b32.xlu0 %v374, 113
        %v489 = vpop.permute.xlu0 %488
        %vm490 = vcmask 924672
        %v491 = vsel %vm490, %v487, %v489
        %v494 = vsel %vm490, %v489, 0.0
        %v495 = vmul.f32 %v491, %v363
        %v496 = vmul.f32 %v494, %v364
        %497 = vset.pattern.permute.xlu0 6
        %498 = vperm.xlu0 %497, %v371
        %v499 = vpop.permute.xlu0 %498
        %v501 = vmul.f32 %v495, %v499
        %v502 = vmul.f32 %v496, %v499
        %v503 = vadd.f32 %v484, %v501
        %v504 = vadd.f32 %v485, %v502
        %505 = vrot.lane.b32.xlu0 %v331, 112
        %v506 = vpop.permute.xlu0 %505
        %507 = vrot.lane.b32.xlu0 %v374, 112
        %v508 = vpop.permute.xlu0 %507
        %vm509 = vcmask 916480
        %v510 = vsel %vm509, %v506, %v508
        %v513 = vsel %vm509, %v508, 0.0
        %514 = vset.pattern.permute.xlu0 7
        %515 = vperm.xlu0 %514, %v371
        %v516 = vpop.permute.xlu0 %515
        %v518 = vmul.f32 %v510, %v516
        %v519 = vmul.f32 %v513, %v516
        %v520 = vadd.f32 %v503, %v518
        %v521 = vadd.f32 %v504, %v519
        %522 = vrot.lane.b32.xlu0 %v331, 111
        %v523 = vpop.permute.xlu0 %522
        %524 = vrot.lane.b32.xlu0 %v374, 111
        %v525 = vpop.permute.xlu0 %524
        %vm526 = vcmask 908288
        %v527 = vsel %vm526, %v523, %v525
        %v530 = vsel %vm526, %v525, 0.0
        %v531 = vmul.f32 %v527, %v369
        %v532 = vmul.f32 %v530, %v370
        %533 = vset.pattern.permute.xlu0 8
        %534 = vperm.xlu0 %533, %v371
        %v535 = vpop.permute.xlu0 %534
        %v537 = vmul.f32 %v531, %v535
        %v538 = vmul.f32 %v532, %v535
        %v539 = vadd.f32 %v520, %v537
        %v540 = vadd.f32 %v521, %v538
        %542 = vset.pattern.permute.xlu0 0
        %543 = vperm.xlu0 %542, %v372
        %v544 = vpop.permute.xlu0 %543
        %v546 = vadd.f32 %v539, %v544
        %v547 = vadd.f32 %v540, %v544
        %v548 = vmax.f32 %v546, 0.0
        %v549 = vmax.f32 %v547, 0.0
        %v550 = vld [vmem:[%s3] sm:$0xff]
        %v551 = vld [vmem:[%s4] sm:$0xff]
        %553 = vset.pattern.permute.xlu0 0
        %554 = vperm.xlu0 %553, %v551
        %v555 = vpop.permute.xlu0 %554
        %vm557 = vcmask 31744
        %v559 = vsel %vm557, %v550, 0
        %vm561 = vcmask 1043456
        %v563 = vsel %vm561, %v548, 0
        %v566 = vsel %vm561, %v549, 0
        %568 = vmatprep.subr.mxu0 0.0
        %569 = vmatpush1.msra.mxu0 0.0
        %570 = vmatprep.subr.mxu0 0.0
        %571 = vmatpush1.msra.mxu0 0.0
        %572 = vmatprep.subr.mxu0 0.0
        %573 = vmatpush1.msra.mxu0 0.0
        %574 = vmatprep.subr.mxu0 0.0
        %575 = vmatpush1.msra.mxu0 0.0
        %576 = vmatprep.subr.mxu0 0.0
        %577 = vmatpush1.msra.mxu0 0.0
        %578 = vmatprep.subr.mxu0 0.0
        %579 = vmatpush1.msra.mxu0 0.0
        %580 = vmatprep.subr.mxu0 0.0
        %581 = vmatpush1.msra.mxu0 0.0
        %582 = vmatprep.subr.mxu0 0.0
        %583 = vmatpush1.msra.mxu0 0.0
        %584 = vmatprep.subr.mxu0 0.0
        %585 = vmatpush1.msra.mxu0 0.0
        %586 = vmatprep.subr.mxu0 0.0
        %587 = vmatpush1.msra.mxu0 0.0
        %588 = vmatprep.subr.mxu0 0.0
        %589 = vmatpush1.msra.mxu0 0.0
        %590 = vmatprep.subr.mxu0 0.0
        %591 = vmatpush1.msra.mxu0 0.0
        %592 = vmatprep.subr.mxu0 0.0
        %593 = vmatpush1.msra.mxu0 0.0
        %594 = vmatprep.subr.mxu0 0.0
        %595 = vmatpush1.msra.mxu0 0.0
        %596 = vmatprep.subr.mxu0 0.0
        %597 = vmatpush1.msra.mxu0 0.0
        %598 = vmatprep.subr.mxu0 %v566
        %599 = vmatpush1.msra.mxu0 %v563
        %600 = vmatprep.subr.mxu0 0.0
        %601 = vmatpush2.msra.mxu0 0.0
        %602 = vmatprep.subr.mxu0 0.0
        %603 = vmatpush2.msra.mxu0 0.0
        %604 = vmatprep.subr.mxu0 0.0
        %605 = vmatpush2.msra.mxu0 0.0
        %606 = vmatprep.subr.mxu0 0.0
        %607 = vmatpush2.msra.mxu0 0.0
        %608 = vmatprep.subr.mxu0 0.0
        %609 = vmatpush2.msra.mxu0 0.0
        %610 = vmatprep.subr.mxu0 0.0
        %611 = vmatpush2.msra.mxu0 0.0
        %612 = vmatprep.subr.mxu0 0.0
        %613 = vmatpush2.msra.mxu0 0.0
        %614 = vmatprep.subr.mxu0 0.0
        %615 = vmatpush2.msra.mxu0 0.0
        %616 = vmatprep.subr.mxu0 0.0
        %617 = vmatpush2.msra.mxu0 0.0
        %618 = vmatprep.subr.mxu0 0.0
        %619 = vmatpush2.msra.mxu0 0.0
        %620 = vmatprep.subr.mxu0 0.0
        %621 = vmatpush2.msra.mxu0 0.0
        %622 = vmatprep.subr.mxu0 0.0
        %623 = vmatpush2.msra.mxu0 0.0
        %624 = vmatprep.subr.mxu0 0.0
        %625 = vmatpush2.msra.mxu0 0.0
        %626 = vmatprep.subr.mxu0 0.0
        %627 = vmatpush2.msra.mxu0 0.0
        %628 = vmatprep.subr.mxu0 0.0
        %629 = vmatpush2.msra.mxu0 0.0
        %630 = vmatprep.subr.mxu0 0.0
        %631 = vmatpush2.msra.mxu0 0.0
        %632 = vmatprep.mubr.f32.mxu0 0.0
        %633 = vmatmul.mubr.f32.gmra.mxu0 %v559
        %v634 = vpop.f32.mrf.mxu0
        %v635 = vadd.f32 %v555, %v634
        %v636 = vpop.f32.mrf.mxu0
        %v637 = vadd.f32 %v555, %v636
        %638 = vdwg.mxu0
        %v639 = vld [vmem:[%s5] sm:$0xff]
        %v640 = vld [vmem:[%s6] sm:$0xff]
        %643 = vrot.lane.b32.xlu0 %v635, 17
        %v644 = vpop.permute.xlu0 %643
        %645 = vrot.lane.b32.xlu0 %v637, 17
        %v646 = vpop.permute.xlu0 %645
        %v647 = vsel %vm379, %v644, %v646
        %v650 = vsel %vm379, 0.0, %v644
        %v651 = vmul.f32 %v650, %v363
        %v652 = vmul.f32 %v647, %v364
        %654 = vset.pattern.permute.xlu0 0
        %655 = vperm.xlu0 %654, %v639
        %v656 = vpop.permute.xlu0 %655
        %v658 = vmul.f32 %v651, %v656
        %v659 = vmul.f32 %v652, %v656
        %v660 = vadd.f32 %v658, 0.0
        %v661 = vadd.f32 %v659, 0.0
        %662 = vrot.lane.b32.xlu0 %v635, 16
        %v663 = vpop.permute.xlu0 %662
        %664 = vrot.lane.b32.xlu0 %v637, 16
        %v665 = vpop.permute.xlu0 %664
        %v666 = vsel %vm399, %v663, %v665
        %v669 = vsel %vm399, 0.0, %v663
        %670 = vset.pattern.permute.xlu0 1
        %671 = vperm.xlu0 %670, %v639
        %v672 = vpop.permute.xlu0 %671
        %v674 = vmul.f32 %v669, %v672
        %v675 = vmul.f32 %v666, %v672
        %v676 = vadd.f32 %v660, %v674
        %v677 = vadd.f32 %v661, %v675
        %678 = vrot.lane.b32.xlu0 %v635, 15
        %v679 = vpop.permute.xlu0 %678
        %680 = vrot.lane.b32.xlu0 %v637, 15
        %v681 = vpop.permute.xlu0 %680
        %v682 = vsel %vm416, %v679, %v681
        %v685 = vsel %vm416, 0.0, %v679
        %v686 = vmul.f32 %v685, %v369
        %v687 = vmul.f32 %v682, %v370
        %688 = vset.pattern.permute.xlu0 2
        %689 = vperm.xlu0 %688, %v639
        %v690 = vpop.permute.xlu0 %689
        %v692 = vmul.f32 %v686, %v690
        %v693 = vmul.f32 %v687, %v690
        %v694 = vadd.f32 %v676, %v692
        %v695 = vadd.f32 %v677, %v693
        %696 = vrot.lane.b32.xlu0 %v635, 1
        %v697 = vpop.permute.xlu0 %696
        %698 = vrot.lane.b32.xlu0 %v637, 1
        %v699 = vpop.permute.xlu0 %698
        %v700 = vsel %vm435, %v697, %v699
        %v703 = vsel %vm435, 0.0, %v697
        %v704 = vmul.f32 %v703, %v363
        %v705 = vmul.f32 %v700, %v364
        %706 = vset.pattern.permute.xlu0 3
        %707 = vperm.xlu0 %706, %v639
        %v708 = vpop.permute.xlu0 %707
        %v710 = vmul.f32 %v704, %v708
        %v711 = vmul.f32 %v705, %v708
        %v712 = vadd.f32 %v694, %v710
        %v713 = vadd.f32 %v695, %v711
        %714 = vset.pattern.permute.xlu0 4
        %715 = vperm.xlu0 %714, %v639
        %v716 = vpop.permute.xlu0 %715
        %v718 = vmul.f32 %v635, %v716
        %v719 = vmul.f32 %v637, %v716
        %v720 = vadd.f32 %v712, %v718
        %v721 = vadd.f32 %v713, %v719
        %722 = vrot.lane.b32.xlu0 %v635, 127
        %v723 = vpop.permute.xlu0 %722
        %724 = vrot.lane.b32.xlu0 %v637, 127
        %v725 = vpop.permute.xlu0 %724
        %v726 = vsel %vm471, %v723, %v725
        %v729 = vsel %vm471, %v725, 0.0
        %v730 = vmul.f32 %v726, %v369
        %v731 = vmul.f32 %v729, %v370
        %732 = vset.pattern.permute.xlu0 5
        %733 = vperm.xlu0 %732, %v639
        %v734 = vpop.permute.xlu0 %733
        %v736 = vmul.f32 %v730, %v734
        %v737 = vmul.f32 %v731, %v734
        %v738 = vadd.f32 %v720, %v736
        %v739 = vadd.f32 %v721, %v737
        %740 = vrot.lane.b32.xlu0 %v635, 113
        %v741 = vpop.permute.xlu0 %740
        %742 = vrot.lane.b32.xlu0 %v637, 113
        %v743 = vpop.permute.xlu0 %742
        %v744 = vsel %vm490, %v741, %v743
        %v747 = vsel %vm490, %v743, 0.0
        %v748 = vmul.f32 %v744, %v363
        %v749 = vmul.f32 %v747, %v364
        %750 = vset.pattern.permute.xlu0 6
        %751 = vperm.xlu0 %750, %v639
        %v752 = vpop.permute.xlu0 %751
        %v754 = vmul.f32 %v748, %v752
        %v755 = vmul.f32 %v749, %v752
        %v756 = vadd.f32 %v738, %v754
        %v757 = vadd.f32 %v739, %v755
        %758 = vrot.lane.b32.xlu0 %v635, 112
        %v759 = vpop.permute.xlu0 %758
        %760 = vrot.lane.b32.xlu0 %v637, 112
        %v761 = vpop.permute.xlu0 %760
        %v762 = vsel %vm509, %v759, %v761
        %v765 = vsel %vm509, %v761, 0.0
        %766 = vset.pattern.permute.xlu0 7
        %767 = vperm.xlu0 %766, %v639
        %v768 = vpop.permute.xlu0 %767
        %v770 = vmul.f32 %v762, %v768
        %v771 = vmul.f32 %v765, %v768
        %v772 = vadd.f32 %v756, %v770
        %v773 = vadd.f32 %v757, %v771
        %774 = vrot.lane.b32.xlu0 %v635, 111
        %v775 = vpop.permute.xlu0 %774
        %776 = vrot.lane.b32.xlu0 %v637, 111
        %v777 = vpop.permute.xlu0 %776
        %v778 = vsel %vm526, %v775, %v777
        %v781 = vsel %vm526, %v777, 0.0
        %v782 = vmul.f32 %v778, %v369
        %v783 = vmul.f32 %v781, %v370
        %784 = vset.pattern.permute.xlu0 8
        %785 = vperm.xlu0 %784, %v639
        %v786 = vpop.permute.xlu0 %785
        %v788 = vmul.f32 %v782, %v786
        %v789 = vmul.f32 %v783, %v786
        %v790 = vadd.f32 %v772, %v788
        %v791 = vadd.f32 %v773, %v789
        %793 = vset.pattern.permute.xlu0 0
        %794 = vperm.xlu0 %793, %v640
        %v795 = vpop.permute.xlu0 %794
        %v797 = vadd.f32 %v790, %v795
        %v798 = vadd.f32 %v791, %v795
        %v799 = vld [vmem:[%s7] sm:$0xff]
        %v800 = vld [vmem:[%s8] sm:$0xff]
        %802 = vset.pattern.permute.xlu0 0
        %803 = vperm.xlu0 %802, %v800
        %v804 = vpop.permute.xlu0 %803
        %v807 = vsel %vm557, %v799, 0
        %v809 = vsel %vm561, %v331, 0
        %v811 = vsel %vm561, %v374, 0
        %813 = vmatprep.subr.mxu0 0.0
        %814 = vmatpush1.msra.mxu0 0.0
        %815 = vmatprep.subr.mxu0 0.0
        %816 = vmatpush1.msra.mxu0 0.0
        %817 = vmatprep.subr.mxu0 0.0
        %818 = vmatpush1.msra.mxu0 0.0
        %819 = vmatprep.subr.mxu0 0.0
        %820 = vmatpush1.msra.mxu0 0.0
        %821 = vmatprep.subr.mxu0 0.0
        %822 = vmatpush1.msra.mxu0 0.0
        %823 = vmatprep.subr.mxu0 0.0
        %824 = vmatpush1.msra.mxu0 0.0
        %825 = vmatprep.subr.mxu0 0.0
        %826 = vmatpush1.msra.mxu0 0.0
        %827 = vmatprep.subr.mxu0 0.0
        %828 = vmatpush1.msra.mxu0 0.0
        %829 = vmatprep.subr.mxu0 0.0
        %830 = vmatpush1.msra.mxu0 0.0
        %831 = vmatprep.subr.mxu0 0.0
        %832 = vmatpush1.msra.mxu0 0.0
        %833 = vmatprep.subr.mxu0 0.0
        %834 = vmatpush1.msra.mxu0 0.0
        %835 = vmatprep.subr.mxu0 0.0
        %836 = vmatpush1.msra.mxu0 0.0
        %837 = vmatprep.subr.mxu0 0.0
        %838 = vmatpush1.msra.mxu0 0.0
        %839 = vmatprep.subr.mxu0 0.0
        %840 = vmatpush1.msra.mxu0 0.0
        %841 = vmatprep.subr.mxu0 0.0
        %842 = vmatpush1.msra.mxu0 0.0
        %843 = vmatprep.subr.mxu0 %v811
        %844 = vmatpush1.msra.mxu0 %v809
        %845 = vmatprep.subr.mxu0 0.0
        %846 = vmatpush2.msra.mxu0 0.0
        %847 = vmatprep.subr.mxu0 0.0
        %848 = vmatpush2.msra.mxu0 0.0
        %849 = vmatprep.subr.mxu0 0.0
        %850 = vmatpush2.msra.mxu0 0.0
        %851 = vmatprep.subr.mxu0 0.0
        %852 = vmatpush2.msra.mxu0 0.0
        %853 = vmatprep.subr.mxu0 0.0
        %854 = vmatpush2.msra.mxu0 0.0
        %855 = vmatprep.subr.mxu0 0.0
        %856 = vmatpush2.msra.mxu0 0.0
        %857 = vmatprep.subr.mxu0 0.0
        %858 = vmatpush2.msra.mxu0 0.0
        %859 = vmatprep.subr.mxu0 0.0
        %860 = vmatpush2.msra.mxu0 0.0
        %861 = vmatprep.subr.mxu0 0.0
        %862 = vmatpush2.msra.mxu0 0.0
        %863 = vmatprep.subr.mxu0 0.0
        %864 = vmatpush2.msra.mxu0 0.0
        %865 = vmatprep.subr.mxu0 0.0
        %866 = vmatpush2.msra.mxu0 0.0
        %867 = vmatprep.subr.mxu0 0.0
        %868 = vmatpush2.msra.mxu0 0.0
        %869 = vmatprep.subr.mxu0 0.0
        %870 = vmatpush2.msra.mxu0 0.0
        %871 = vmatprep.subr.mxu0 0.0
        %872 = vmatpush2.msra.mxu0 0.0
        %873 = vmatprep.subr.mxu0 0.0
        %874 = vmatpush2.msra.mxu0 0.0
        %875 = vmatprep.subr.mxu0 0.0
        %876 = vmatpush2.msra.mxu0 0.0
        %877 = vmatprep.mubr.f32.mxu0 0.0
        %878 = vmatmul.mubr.f32.gmra.mxu0 %v807
        %v879 = vpop.f32.mrf.mxu0
        %v880 = vadd.f32 %v804, %v879
        %v881 = vpop.f32.mrf.mxu0
        %v882 = vadd.f32 %v804, %v881
        %883 = vdwg.mxu0
        %v884 = vadd.f32 %v880, %v797
        %v885 = vadd.f32 %v882, %v798
        %v886 = vmax.f32 %v884, 0.0
        %v887 = vmax.f32 %v885, 0.0
        %888 = vst [vmem:[%s325] sm:$0xff] %v886
        %889 = vst [vmem:[%s325 + $0x8] sm:$0xff] %v887
        %s890 = sand.u32 %s225, 1
        %s891 = scalar_lea.sflag [#allocation3], %s890
        %s892 = sand.u32 %s225, 1
        %s893 = smul.addr %s892, 16
        %s894 = scalar_lea.vmem [#allocation2], %s893
        // Predicated region
        $region57: #{tpu_custom_call.1} parent=55 // pred_check
          %p895 = pneg %p235
        $region58: #{tpu_custom_call.1} parent=55 // pred_check_branch
          %897 = sbr.rel (%p895) target = $region60
        $region59: #{tpu_custom_call.1} parent=55 // pred_region
          %s899 = ssub.s32 256, 256
          %900 = vsyncadd %s891, %s899
          %s901 = smul.addr %s23, 2
          %s902 = smul.addr %s901, 128
          %s903 = scalar_lea.hbm %s9, %s902
          %s905 = sshll.u32 %s894, 4
          %s906 = int_to_ptr.vmem [resolvable:$true] %s905
          %908 = dma.vmem_to_hbm [thread:$0]  %s906, 256, %s903, %s891
        $region60: #{tpu_custom_call.1} parent=55 // pred_fallthru
          _
      $region56: #{tpu_custom_call.1} parent=5 // pred_fallthru
        _
      %p909 = scmp.le.s32.totalorder 2, %s18
      // Predicated region
      $region61: #{tpu_custom_call.1} parent=5 // pred_check
        %p910 = pneg %p909
      $region62: #{tpu_custom_call.1} parent=5 // pred_check_branch
        %912 = sbr.rel (%p910) target = $region64
      $region63: #{tpu_custom_call.1} parent=5 // pred_region
        %s913 = ssub.s32 %s18, 2
        // Predicated region
        $region65: #{tpu_custom_call.1} parent=63 // pred_check
          %p914 = pneg %p241
        $region66: #{tpu_custom_call.1} parent=63 // pred_check_branch
          %916 = sbr.rel (%p914) target = $region68
        $region67: #{tpu_custom_call.1} parent=63 // pred_region
          %s917 = sand.u32 %s226, 1
          %s918 = scalar_lea.sflag [#allocation3], %s917
          %s919 = sand.u32 %s226, 1
          %s920 = smul.addr %s919, 16
          %s921 = scalar_lea.vmem [#allocation2], %s920
          %922 = dma.done %s918, 256
        $region68: #{tpu_custom_call.1} parent=63 // pred_fallthru
          _
      $region64: #{tpu_custom_call.1} parent=5 // pred_fallthru
        _
    $region6: #{tpu_custom_call.1} parent=1 // loop_footer
      %s22 = sadd.s32 1, %s18
    $region7: #{tpu_custom_call.1} parent=1 // loop_footer_branch
      %17 = sbr.rel target = $region3
    $region8: #{tpu_custom_call.1} parent=1 // loop_exit
      _
    %923 = vsyncpa [#allocation3], 1
    %s924 = scalar_lea.sflag [#allocation3], 1
    %925 = vsyncpa %s924, 1

</llo_original>
